<compile_context>
chip_gen: v7x
topology: tpu7x:2x2x1
jax: 0.10.0
libtpu: 0.0.40
codegen_flags: <defaults>
</compile_context>

<pallas_src>
import functools

import jax
import jax.numpy as jnp
from jax import lax
from jax.experimental import pallas as pl
from jax.experimental.pallas import tpu as pltpu


def _res_conv1d_kernel(x_ref, w1_ref, w2_ref, alpha_ref, out_ref, *scratch,
                       K, d, s, pad_left, L, n_out, Cin):
    """Fused Res_Conv1d forward for one batch block (Bb samples)."""
    f32 = jnp.float32
    Bb = x_ref.shape[0]
    KC = K * Cin                       # im2col rows without the ones row
    if s > 1:
        xstk_ref, ustkT_ref, ut_ref = scratch
    else:
        xstk_ref, ustk_ref = scratch

    a1 = alpha_ref[0]                  # PReLU alphas (scalars) from SMEM
    a2 = alpha_ref[1]

    # ---------------- conv1 'same' (+bias+BN folded into w1) ----------------
    # Batch-stacked im2col (KC+1, Bb*L).  Everything (ones row, halo zeros, interior)
    # is rewritten every grid step -> no persistent-init assumption -> megacore safe.
    xstk_ref[KC:KC + 1, :] = jnp.ones((1, Bb * L), xstk_ref.dtype)   # fused bias/BN shift
    for bi in range(Bb):               # static unroll; stores only, matmul is stacked
        xs = x_ref[bi]                 # (Cin, L)
        c0 = bi * L
        for k in range(K):
            src0 = k * d - pad_left    # static per-tap shift ('same' padding)
            lo = max(0, -src0)
            hi = min(L, L - src0)
            rows = slice(k * Cin, (k + 1) * Cin)
            if lo > 0:                 # left halo (zeros)
                xstk_ref[rows, c0:c0 + lo] = jnp.zeros((Cin, lo), xstk_ref.dtype)
            if hi > lo:                # interior
                xstk_ref[rows, c0 + lo:c0 + hi] = \
                    xs[:, lo + src0:hi + src0].astype(xstk_ref.dtype)
            if hi < L:                 # right halo (zeros)
                xstk_ref[rows, c0 + hi:c0 + L] = jnp.zeros((Cin, L - hi), xstk_ref.dtype)

    # ONE stacked matmul for the whole batch block.
    acc1 = jnp.dot(w1_ref[...], xstk_ref[...], preferred_element_type=f32)   # (Cin, Bb*L)
    y1 = jnp.where(acc1 > 0, acc1, a1 * acc1)                                # PReLU

    # --------- conv2 'valid' grouped strided (+bias+BN folded, block-diag) ---------
    if s > 1:
        # Stride applied in-kernel: u^T in VMEM so the stride-s decimation is a
        # sublane-strided pl.ds read; the im2col is kept transposed (Bb*n_out, KC+1)
        # and consumed with an A @ B^T dot -> no output transposes, lane-dense z.
        ustkT_ref[:, KC:KC + 1] = jnp.ones((Bb * n_out, 1), ustkT_ref.dtype)
        for bi in range(Bb):
            u_b = y1[:, bi * L:(bi + 1) * L] + x_ref[bi].astype(f32)         # residual
            ut_ref[...] = u_b.T.astype(ut_ref.dtype)                         # (L, Cin)
            r0 = bi * n_out
            for k in range(K):
                ustkT_ref[r0:r0 + n_out, k * Cin:(k + 1) * Cin] = \
                    ut_ref[pl.ds(k * d, n_out, stride=s), :]
        z = lax.dot_general(w2_ref[...], ustkT_ref[...],
                            (((1,), (1,)), ((), ())),
                            preferred_element_type=f32)                      # (Cout, Bb*n_out)
    else:
        # stride == 1: fully lane-major, contiguous slices only, no transposes.
        ustk_ref[KC:KC + 1, :] = jnp.ones((1, Bb * n_out), ustk_ref.dtype)
        for bi in range(Bb):
            u_b = y1[:, bi * L:(bi + 1) * L] + x_ref[bi].astype(f32)         # residual
            c0 = bi * n_out
            for k in range(K):
                ustk_ref[k * Cin:(k + 1) * Cin, c0:c0 + n_out] = \
                    u_b[:, k * d:k * d + n_out].astype(ustk_ref.dtype)
        z = jnp.dot(w2_ref[...], ustk_ref[...], preferred_element_type=f32)  # (Cout, Bb*n_out)

    z = jnp.where(z > 0, z, a2 * z)                                          # PReLU
    for bi in range(Bb):
        out_ref[bi] = z[:, bi * n_out:(bi + 1) * n_out].astype(out_ref.dtype)


def _bn_fuse(gamma, beta, mean, var, bias, eps=1e-5):
    """Fuse conv bias + inference BatchNorm into per-channel scale/shift."""
    scale = gamma / jnp.sqrt(var + eps)
    shift = beta + scale * (bias - mean)
    return scale.astype(jnp.float32), shift.astype(jnp.float32)


def _res_conv1d_pallas(x, p, *, kernel_size, stride, dilation, groups,
                       mxu_dtype=jnp.float32):
    B, Cin, L = x.shape
    Cout = p["w2"].shape[0]
    K, d, s = kernel_size, dilation, stride
    Cing = Cin // groups
    Coutg = Cout // groups
    KC1 = K * Cin + 1

    total_pad = d * (K - 1)                 # PyTorch 'same' padding (stride-1 conv1)
    pad_left = total_pad // 2
    Lv = L - d * (K - 1)                    # stride-1 'valid' length of conv2
    assert Lv >= 1, "sequence too short for the valid conv2"
    n_out = (Lv - 1) // s + 1               # true strided output length

    # Fold conv bias + inference BN into augmented weights (shift consumed against the
    # constant ones row of the im2col).
    s1, h1 = _bn_fuse(p["bn1_gamma"], p["bn1_beta"], p["bn1_mean"], p["bn1_var"], p["b1"])
    s2, h2 = _bn_fuse(p["bn2_gamma"], p["bn2_beta"], p["bn2_mean"], p["bn2_var"], p["b2"])

    w1_flat = jnp.transpose(p["w1"], (0, 2, 1)).reshape(Cin, K * Cin)       # [o, k*Cin+c]
    w1_aug = jnp.concatenate([s1[:, None] * w1_flat, h1[:, None]], axis=1)  # (Cin, KC1)
    w1_aug = w1_aug.astype(mxu_dtype)

    # Block-diagonal grouped conv2 weights: (Cout, K*Cin) with zero off-group blocks.
    w2_kc = (s2[:, None, None] * jnp.transpose(p["w2"], (0, 2, 1)))         # (Cout, K, Cing)
    w2_kc = w2_kc.reshape(groups, Coutg, K, Cing)
    eye_g = jnp.eye(groups, dtype=jnp.float32)
    w2_bd = jnp.einsum("gokc,gh->gokhc", w2_kc, eye_g).reshape(Cout, K * Cin)
    w2_aug = jnp.concatenate([w2_bd, h2[:, None]], axis=1).astype(mxu_dtype)  # (Cout, KC1)

    alphas = jnp.stack([p["prelu1"].reshape(()), p["prelu2"].reshape(())])
    alphas = alphas.astype(jnp.float32)                                     # (2,) -> SMEM

    # ----- per-generation VMEM sizing: derive Bb and the scoped-VMEM limit -----
    try:
        vmem_cap = int(pltpu.get_tpu_info().vmem_capacity_bytes)
    except Exception:
        vmem_cap = 64 * 1024 * 1024          # conservative (v7x) fallback
    vmem_limit = min(vmem_cap // 2, 96 * 1024 * 1024)
    target = vmem_limit // 2                 # headroom for compiler-internal scratch

    in_itm = jnp.dtype(x.dtype).itemsize
    mx_itm = jnp.dtype(mxu_dtype).itemsize

    def _vmem_bytes(bb):
        blocks = 2 * bb * Cin * L * in_itm + 2 * bb * Cout * n_out * in_itm   # dbl-buffered
        weights = 2 * (Cin + Cout) * KC1 * mx_itm
        scr = KC1 * bb * (L + n_out) * mx_itm + (L * Cin * mx_itm if s > 1 else 0)
        return blocks + weights + scr

    Bb = 1
    for c in range(min(B, 16), 0, -1):       # several samples per grid step (amortize
        if B % c == 0 and _vmem_bytes(c) <= target:   # per-step overhead, fill MXU N)
            Bb = c
            break

    if s > 1:
        scratch_shapes = [
            pltpu.VMEM((KC1, Bb * L), mxu_dtype),        # conv1 im2col (+ones row)
            pltpu.VMEM((Bb * n_out, KC1), mxu_dtype),    # conv2 im2col, transposed
            pltpu.VMEM((L, Cin), mxu_dtype),             # u^T (time on sublanes)
        ]
    else:
        scratch_shapes = [
            pltpu.VMEM((KC1, Bb * L), mxu_dtype),        # conv1 im2col (+ones row)
            pltpu.VMEM((KC1, Bb * n_out), mxu_dtype),    # conv2 im2col (+ones row)
        ]

    kernel = functools.partial(
        _res_conv1d_kernel, K=K, d=d, s=s, pad_left=pad_left, L=L,
        n_out=n_out, Cin=Cin)

    out = pl.pallas_call(
        kernel,
        out_shape=jax.ShapeDtypeStruct((B, Cout, n_out), x.dtype),
        grid=(B // Bb,),
        in_specs=[
            pl.BlockSpec((Bb, Cin, L), lambda b: (b, 0, 0)),     # raw x, no wrapper pad
            pl.BlockSpec((Cin, KC1), lambda b: (0, 0)),          # fused conv1 weights
            pl.BlockSpec((Cout, KC1), lambda b: (0, 0)),         # fused block-diag conv2
            pl.BlockSpec(memory_space=pltpu.MemorySpace.SMEM),   # PReLU alphas (scalars)
        ],
        out_specs=pl.BlockSpec((Bb, Cout, n_out), lambda b: (b, 0, 0)),
        scratch_shapes=scratch_shapes,
        compiler_params=pltpu.CompilerParams(
            dimension_semantics=("parallel",),
            vmem_limit_bytes=int(vmem_limit)),
    )(x, w1_aug, w2_aug, alphas)
    return out


def res_conv1d_forward(x, p, *, kernel_size, stride=1, dilation=1, groups=1,
                       mxu_dtype=jnp.float32):
    """Forward pass of Res_Conv1d (inference-mode BatchNorm). One kernel, no host sync,
    no wrapper padding/striding passes.  Set mxu_dtype=jnp.bfloat16 for full-rate MXU."""
    return _res_conv1d_pallas(x, p, kernel_size=kernel_size, stride=stride,
                              dilation=dilation, groups=groups, mxu_dtype=mxu_dtype)


def res_conv1d_reference(x, p, *, kernel_size, stride=1, dilation=1, groups=1):
    """Pure-JAX reference (PyTorch semantics, inference-mode BatchNorm)."""
    eps = 1e-5
    dn = ("NCH", "OIH", "NCH")
    total = dilation * (kernel_size - 1)
    lpad, rpad = total // 2, total - total // 2

    def bn(z, gamma, beta, mean, var):
        return (gamma[None, :, None] * (z - mean[None, :, None])
                / jnp.sqrt(var[None, :, None] + eps) + beta[None, :, None])

    z = lax.conv_general_dilated(x, p["w1"], window_strides=(1,),
                                 padding=[(lpad, rpad)], rhs_dilation=(dilation,),
                                 dimension_numbers=dn)
    z = z + p["b1"][None, :, None]
    z = bn(z, p["bn1_gamma"], p["bn1_beta"], p["bn1_mean"], p["bn1_var"])
    z = jnp.where(z > 0, z, p["prelu1"] * z)
    u = z + x

    z2 = lax.conv_general_dilated(u, p["w2"], window_strides=(stride,),
                                  padding="VALID", rhs_dilation=(dilation,),
                                  dimension_numbers=dn, feature_group_count=groups)
    z2 = z2 + p["b2"][None, :, None]
    z2 = bn(z2, p["bn2_gamma"], p["bn2_beta"], p["bn2_mean"], p["bn2_var"])
    z2 = jnp.where(z2 > 0, z2, p["prelu2"] * z2)
    return z2


def init_params(key, in_channels, out_channels, kernel_size, groups):
    ks = jax.random.split(key, 12)
    f32 = jnp.float32
    return {
        "w1": 0.3 * jax.random.normal(ks[0], (in_channels, in_channels, kernel_size), f32),
        "b1": 0.1 * jax.random.normal(ks[1], (in_channels,), f32),
        "bn1_gamma": 1.0 + 0.1 * jax.random.normal(ks[2], (in_channels,), f32),
        "bn1_beta": 0.1 * jax.random.normal(ks[3], (in_channels,), f32),
        "bn1_mean": 0.1 * jax.random.normal(ks[4], (in_channels,), f32),
        "bn1_var": 1.0 + 0.1 * jnp.abs(jax.random.normal(ks[5], (in_channels,), f32)),
        "prelu1": jnp.array(0.25, f32),                    # PyTorch PReLU default (scalar)
        "w2": 0.3 * jax.random.normal(ks[6], (out_channels, in_channels // groups, kernel_size), f32),
        "b2": 0.1 * jax.random.normal(ks[7], (out_channels,), f32),
        "bn2_gamma": 1.0 + 0.1 * jax.random.normal(ks[8], (out_channels,), f32),
        "bn2_beta": 0.1 * jax.random.normal(ks[9], (out_channels,), f32),
        "bn2_mean": 0.1 * jax.random.normal(ks[10], (out_channels,), f32),
        "bn2_var": 1.0 + 0.1 * jnp.abs(jax.random.normal(ks[11], (out_channels,), f32)),
        "prelu2": jnp.array(0.25, f32),
    }


if __name__ == "__main__":
    key = jax.random.PRNGKey(0)

    # Config 1: strided, dilated, grouped (exercises the in-kernel stride path).
    B, Cin, Cout, L = 2, 4, 8, 16
    kernel_size, stride, dilation, groups = 3, 2, 2, 2
    kx, kp, key = jax.random.split(key, 3)
    x = jax.random.normal(kx, (B, Cin, L), jnp.float32)
    params = init_params(kp, Cin, Cout, kernel_size, groups)

    out = res_conv1d_forward(x, params, kernel_size=kernel_size, stride=stride,
                             dilation=dilation, groups=groups)
    out = jax.block_until_ready(out)
    ref = res_conv1d_reference(x, params, kernel_size=kernel_size, stride=stride,
                               dilation=dilation, groups=groups)
    assert out.shape == ref.shape, (out.shape, ref.shape)
    err1 = float(jnp.max(jnp.abs(out - ref)))
    assert jnp.allclose(out, ref, rtol=1e-4, atol=1e-4), err1

    # Config 2: plain stride-1 / dilation-1 / ungrouped path.
    kx2, kp2, key = jax.random.split(key, 3)
    x2 = jax.random.normal(kx2, (B, Cin, L), jnp.float32)
    params2 = init_params(kp2, Cin, Cout, kernel_size, 1)
    out2 = res_conv1d_forward(x2, params2, kernel_size=kernel_size, stride=1,
                              dilation=1, groups=1)
    out2 = jax.block_until_ready(out2)
    ref2 = res_conv1d_reference(x2, params2, kernel_size=kernel_size, stride=1,
                                dilation=1, groups=1)
    assert out2.shape == ref2.shape, (out2.shape, ref2.shape)
    err2 = float(jnp.max(jnp.abs(out2 - ref2)))
    assert jnp.allclose(out2, ref2, rtol=1e-4, atol=1e-4), err2

    print("KERNEL_OK")
</pallas_src>

<mosaic_0001>
module attributes {stable_mosaic.version = 11 : i64} {
  func.func @_res_conv1d_kernel(%arg0: i32, %arg1: memref<2x4x16xf32, #tpu.memory_space<vmem>>, %arg2: memref<4x13xf32, #tpu.memory_space<vmem>>, %arg3: memref<8x13xf32, #tpu.memory_space<vmem>>, %arg4: memref<2xf32, #tpu.memory_space<smem>>, %arg5: memref<2x8x6xf32, #tpu.memory_space<vmem>>, %arg6: memref<13x32xf32, #tpu.memory_space<vmem>>, %arg7: memref<12x13xf32, #tpu.memory_space<vmem>>, %arg8: memref<16x4xf32, #tpu.memory_space<vmem>>) attributes {dimension_semantics = [#tpu.dimension_semantics<parallel>], iteration_bounds = array<i64: 1>, scalar_prefetch = 0 : i64, scratch_operands = 3 : i64, tpu.core_type = #tpu.core_type<tc>, window_params = [{transform_indices = @transform_0, window_bounds = array<i64: 2, 4, 16>}, {pipeline_mode = #tpu.pipeline_mode<synchronous>, transform_indices = @transform_1, window_bounds = array<i64: 4, 13>}, {pipeline_mode = #tpu.pipeline_mode<synchronous>, transform_indices = @transform_2, window_bounds = array<i64: 8, 13>}, {transform_indices = @transform_3, window_bounds = array<i64: 2>}, {transform_indices = @transform_4, window_bounds = array<i64: 2, 8, 6>}]} {
    %c0 = arith.constant 0 : index
    %0 = memref.load %arg4[%c0] : memref<2xf32, #tpu.memory_space<smem>>
    %c1 = arith.constant 1 : index
    %1 = memref.load %arg4[%c1] : memref<2xf32, #tpu.memory_space<smem>>
    %cst = arith.constant 1.000000e+00 : f32
    %2 = vector.broadcast %cst : f32 to vector<1x32xf32>
    %c12 = arith.constant 12 : index
    %c0_0 = arith.constant 0 : index
    %3 = vector.load %arg6[%c12, %c0_0] : memref<13x32xf32, #tpu.memory_space<vmem>>, vector<1x32xf32>
    tpu.vector_store %arg6[%c12, %c0_0], %2 {strides = array<i32>} : memref<13x32xf32, #tpu.memory_space<vmem>>, vector<1x32xf32>,
    %c0_1 = arith.constant 0 : index
    %c0_2 = arith.constant 0 : index
    %c0_3 = arith.constant 0 : index
    %4 = vector.load %arg1[%c0_1, %c0_2, %c0_3] : memref<2x4x16xf32, #tpu.memory_space<vmem>>, vector<1x4x16xf32>
    %5 = vector.shape_cast %4 : vector<1x4x16xf32> to vector<4x16xf32>
    %cst_4 = arith.constant 0.000000e+00 : f32
    %6 = vector.broadcast %cst_4 : f32 to vector<4x2xf32>
    %c0_5 = arith.constant 0 : index
    %c0_6 = arith.constant 0 : index
    %7 = vector.load %arg6[%c0_5, %c0_6] : memref<13x32xf32, #tpu.memory_space<vmem>>, vector<4x2xf32>
    tpu.vector_store %arg6[%c0_5, %c0_6], %6 {strides = array<i32>} : memref<13x32xf32, #tpu.memory_space<vmem>>, vector<4x2xf32>,
    %8 = vector.extract_strided_slice %5 {offsets = [0, 0], sizes = [4, 14], strides = [1, 1]} : vector<4x16xf32> to vector<4x14xf32>
    %c0_7 = arith.constant 0 : index
    %c2 = arith.constant 2 : index
    %9 = vector.load %arg6[%c0_7, %c2] : memref<13x32xf32, #tpu.memory_space<vmem>>, vector<4x14xf32>
    tpu.vector_store %arg6[%c0_7, %c2], %8 {strides = array<i32>} : memref<13x32xf32, #tpu.memory_space<vmem>>, vector<4x14xf32>,
    %c4 = arith.constant 4 : index
    %c0_8 = arith.constant 0 : index
    %10 = vector.load %arg6[%c4, %c0_8] : memref<13x32xf32, #tpu.memory_space<vmem>>, vector<4x16xf32>
    tpu.vector_store %arg6[%c4, %c0_8], %5 {strides = array<i32>} : memref<13x32xf32, #tpu.memory_space<vmem>>, vector<4x16xf32>,
    %11 = vector.extract_strided_slice %5 {offsets = [0, 2], sizes = [4, 14], strides = [1, 1]} : vector<4x16xf32> to vector<4x14xf32>
    %c8 = arith.constant 8 : index
    %c0_9 = arith.constant 0 : index
    %12 = vector.load %arg6[%c8, %c0_9] : memref<13x32xf32, #tpu.memory_space<vmem>>, vector<4x14xf32>
    tpu.vector_store %arg6[%c8, %c0_9], %11 {strides = array<i32>} : memref<13x32xf32, #tpu.memory_space<vmem>>, vector<4x14xf32>,
    %cst_10 = arith.constant 0.000000e+00 : f32
    %13 = vector.broadcast %cst_10 : f32 to vector<4x2xf32>
    %c8_11 = arith.constant 8 : index
    %c14 = arith.constant 14 : index
    %14 = vector.load %arg6[%c8_11, %c14] : memref<13x32xf32, #tpu.memory_space<vmem>>, vector<4x2xf32>
    tpu.vector_store %arg6[%c8_11, %c14], %13 {strides = array<i32>} : memref<13x32xf32, #tpu.memory_space<vmem>>, vector<4x2xf32>,
    %c1_12 = arith.constant 1 : index
    %c0_13 = arith.constant 0 : index
    %c0_14 = arith.constant 0 : index
    %15 = vector.load %arg1[%c1_12, %c0_13, %c0_14] : memref<2x4x16xf32, #tpu.memory_space<vmem>>, vector<1x4x16xf32>
    %16 = vector.shape_cast %15 : vector<1x4x16xf32> to vector<4x16xf32>
    %cst_15 = arith.constant 0.000000e+00 : f32
    %17 = vector.broadcast %cst_15 : f32 to vector<4x2xf32>
    %c0_16 = arith.constant 0 : index
    %c16 = arith.constant 16 : index
    %18 = vector.load %arg6[%c0_16, %c16] : memref<13x32xf32, #tpu.memory_space<vmem>>, vector<4x2xf32>
    tpu.vector_store %arg6[%c0_16, %c16], %17 {strides = array<i32>} : memref<13x32xf32, #tpu.memory_space<vmem>>, vector<4x2xf32>,
    %19 = vector.extract_strided_slice %16 {offsets = [0, 0], sizes = [4, 14], strides = [1, 1]} : vector<4x16xf32> to vector<4x14xf32>
    %c0_17 = arith.constant 0 : index
    %c18 = arith.constant 18 : index
    %20 = vector.load %arg6[%c0_17, %c18] : memref<13x32xf32, #tpu.memory_space<vmem>>, vector<4x14xf32>
    tpu.vector_store %arg6[%c0_17, %c18], %19 {strides = array<i32>} : memref<13x32xf32, #tpu.memory_space<vmem>>, vector<4x14xf32>,
    %c4_18 = arith.constant 4 : index
    %c16_19 = arith.constant 16 : index
    %21 = vector.load %arg6[%c4_18, %c16_19] : memref<13x32xf32, #tpu.memory_space<vmem>>, vector<4x16xf32>
    tpu.vector_store %arg6[%c4_18, %c16_19], %16 {strides = array<i32>} : memref<13x32xf32, #tpu.memory_space<vmem>>, vector<4x16xf32>,
    %22 = vector.extract_strided_slice %16 {offsets = [0, 2], sizes = [4, 14], strides = [1, 1]} : vector<4x16xf32> to vector<4x14xf32>
    %c8_20 = arith.constant 8 : index
    %c16_21 = arith.constant 16 : index
    %23 = vector.load %arg6[%c8_20, %c16_21] : memref<13x32xf32, #tpu.memory_space<vmem>>, vector<4x14xf32>
    tpu.vector_store %arg6[%c8_20, %c16_21], %22 {strides = array<i32>} : memref<13x32xf32, #tpu.memory_space<vmem>>, vector<4x14xf32>,
    %cst_22 = arith.constant 0.000000e+00 : f32
    %24 = vector.broadcast %cst_22 : f32 to vector<4x2xf32>
    %c8_23 = arith.constant 8 : index
    %c30 = arith.constant 30 : index
    %25 = vector.load %arg6[%c8_23, %c30] : memref<13x32xf32, #tpu.memory_space<vmem>>, vector<4x2xf32>
    tpu.vector_store %arg6[%c8_23, %c30], %24 {strides = array<i32>} : memref<13x32xf32, #tpu.memory_space<vmem>>, vector<4x2xf32>,
    %c0_24 = arith.constant 0 : index
    %c0_25 = arith.constant 0 : index
    %26 = vector.load %arg2[%c0_24, %c0_25] : memref<4x13xf32, #tpu.memory_space<vmem>>, vector<4x13xf32>
    %c0_26 = arith.constant 0 : index
    %c0_27 = arith.constant 0 : index
    %27 = vector.load %arg6[%c0_26, %c0_27] : memref<13x32xf32, #tpu.memory_space<vmem>>, vector<13x32xf32>
    %cst_28 = arith.constant dense<0.000000e+00> : vector<4x32xf32>
    %28 = tpu.matmul %26, %27, %cst_28 {dimension_numbers = #tpu.dot_dimension_numbers<[1], [0], [0], [1], [0, 0, 1, 1], [], []>} : vector<4x13xf32>, vector<13x32xf32>, vector<4x32xf32> -> vector<4x32xf32>
    %cst_29 = arith.constant 0.000000e+00 : f32
    %29 = vector.broadcast %cst_29 : f32 to vector<4x32xf32>
    %30 = arith.cmpf ogt, %28, %29 : vector<4x32xf32>
    %31 = vector.broadcast %0 : f32 to vector<4x32xf32>
    %32 = arith.mulf %31, %28 : vector<4x32xf32>
    %33 = arith.select %30, %28, %32 : vector<4x32xi1>, vector<4x32xf32>
    %cst_30 = arith.constant 1.000000e+00 : f32
    %34 = vector.broadcast %cst_30 : f32 to vector<12x1xf32>
    %c0_31 = arith.constant 0 : index
    %c12_32 = arith.constant 12 : index
    %35 = vector.load %arg7[%c0_31, %c12_32] : memref<12x13xf32, #tpu.memory_space<vmem>>, vector<12x1xf32>
    tpu.vector_store %arg7[%c0_31, %c12_32], %34 {strides = array<i32>} : memref<12x13xf32, #tpu.memory_space<vmem>>, vector<12x1xf32>,
    %36 = vector.extract_strided_slice %33 {offsets = [0, 0], sizes = [4, 16], strides = [1, 1]} : vector<4x32xf32> to vector<4x16xf32>
    %c0_33 = arith.constant 0 : index
    %c0_34 = arith.constant 0 : index
    %c0_35 = arith.constant 0 : index
    %37 = vector.load %arg1[%c0_33, %c0_34, %c0_35] : memref<2x4x16xf32, #tpu.memory_space<vmem>>, vector<1x4x16xf32>
    %38 = vector.shape_cast %37 : vector<1x4x16xf32> to vector<4x16xf32>
    %39 = arith.addf %36, %38 : vector<4x16xf32>
    %40 = tpu.transpose %39, [1, 0] : vector<4x16xf32> -> vector<16x4xf32>
    %c0_36 = arith.constant 0 : index
    %c0_37 = arith.constant 0 : index
    %41 = vector.load %arg8[%c0_36, %c0_37] : memref<16x4xf32, #tpu.memory_space<vmem>>, vector<16x4xf32>
    tpu.vector_store %arg8[%c0_36, %c0_37], %40 {strides = array<i32>} : memref<16x4xf32, #tpu.memory_space<vmem>>, vector<16x4xf32>,
    %c0_38 = arith.constant 0 : index
    %c0_39 = arith.constant 0 : index
    %42 = tpu.strided_load %arg8[%c0_38, %c0_39] {strides = array<i32: 2, 1>} : memref<16x4xf32, #tpu.memory_space<vmem>>, vector<6x4xf32>
    %c0_40 = arith.constant 0 : index
    %c0_41 = arith.constant 0 : index
    %43 = vector.load %arg7[%c0_40, %c0_41] : memref<12x13xf32, #tpu.memory_space<vmem>>, vector<6x4xf32>
    tpu.vector_store %arg7[%c0_40, %c0_41], %42 {strides = array<i32>} : memref<12x13xf32, #tpu.memory_space<vmem>>, vector<6x4xf32>,
    %c2_42 = arith.constant 2 : index
    %c0_43 = arith.constant 0 : index
    %44 = tpu.strided_load %arg8[%c2_42, %c0_43] {strides = array<i32: 2, 1>} : memref<16x4xf32, #tpu.memory_space<vmem>>, vector<6x4xf32>
    %c0_44 = arith.constant 0 : index
    %c4_45 = arith.constant 4 : index
    %45 = vector.load %arg7[%c0_44, %c4_45] : memref<12x13xf32, #tpu.memory_space<vmem>>, vector<6x4xf32>
    tpu.vector_store %arg7[%c0_44, %c4_45], %44 {strides = array<i32>} : memref<12x13xf32, #tpu.memory_space<vmem>>, vector<6x4xf32>,
    %c4_46 = arith.constant 4 : index
    %c0_47 = arith.constant 0 : index
    %46 = tpu.strided_load %arg8[%c4_46, %c0_47] {strides = array<i32: 2, 1>} : memref<16x4xf32, #tpu.memory_space<vmem>>, vector<6x4xf32>
    %c0_48 = arith.constant 0 : index
    %c8_49 = arith.constant 8 : index
    %47 = vector.load %arg7[%c0_48, %c8_49] : memref<12x13xf32, #tpu.memory_space<vmem>>, vector<6x4xf32>
    tpu.vector_store %arg7[%c0_48, %c8_49], %46 {strides = array<i32>} : memref<12x13xf32, #tpu.memory_space<vmem>>, vector<6x4xf32>,
    %48 = vector.extract_strided_slice %33 {offsets = [0, 16], sizes = [4, 16], strides = [1, 1]} : vector<4x32xf32> to vector<4x16xf32>
    %c1_50 = arith.constant 1 : index
    %c0_51 = arith.constant 0 : index
    %c0_52 = arith.constant 0 : index
    %49 = vector.load %arg1[%c1_50, %c0_51, %c0_52] : memref<2x4x16xf32, #tpu.memory_space<vmem>>, vector<1x4x16xf32>
    %50 = vector.shape_cast %49 : vector<1x4x16xf32> to vector<4x16xf32>
    %51 = arith.addf %48, %50 : vector<4x16xf32>
    %52 = tpu.transpose %51, [1, 0] : vector<4x16xf32> -> vector<16x4xf32>
    %c0_53 = arith.constant 0 : index
    %c0_54 = arith.constant 0 : index
    %53 = vector.load %arg8[%c0_53, %c0_54] : memref<16x4xf32, #tpu.memory_space<vmem>>, vector<16x4xf32>
    tpu.vector_store %arg8[%c0_53, %c0_54], %52 {strides = array<i32>} : memref<16x4xf32, #tpu.memory_space<vmem>>, vector<16x4xf32>,
    %c0_55 = arith.constant 0 : index
    %c0_56 = arith.constant 0 : index
    %54 = tpu.strided_load %arg8[%c0_55, %c0_56] {strides = array<i32: 2, 1>} : memref<16x4xf32, #tpu.memory_space<vmem>>, vector<6x4xf32>
    %c6 = arith.constant 6 : index
    %c0_57 = arith.constant 0 : index
    %55 = vector.load %arg7[%c6, %c0_57] : memref<12x13xf32, #tpu.memory_space<vmem>>, vector<6x4xf32>
    tpu.vector_store %arg7[%c6, %c0_57], %54 {strides = array<i32>} : memref<12x13xf32, #tpu.memory_space<vmem>>, vector<6x4xf32>,
    %c2_58 = arith.constant 2 : index
    %c0_59 = arith.constant 0 : index
    %56 = tpu.strided_load %arg8[%c2_58, %c0_59] {strides = array<i32: 2, 1>} : memref<16x4xf32, #tpu.memory_space<vmem>>, vector<6x4xf32>
    %c6_60 = arith.constant 6 : index
    %c4_61 = arith.constant 4 : index
    %57 = vector.load %arg7[%c6_60, %c4_61] : memref<12x13xf32, #tpu.memory_space<vmem>>, vector<6x4xf32>
    tpu.vector_store %arg7[%c6_60, %c4_61], %56 {strides = array<i32>} : memref<12x13xf32, #tpu.memory_space<vmem>>, vector<6x4xf32>,
    %c4_62 = arith.constant 4 : index
    %c0_63 = arith.constant 0 : index
    %58 = tpu.strided_load %arg8[%c4_62, %c0_63] {strides = array<i32: 2, 1>} : memref<16x4xf32, #tpu.memory_space<vmem>>, vector<6x4xf32>
    %c6_64 = arith.constant 6 : index
    %c8_65 = arith.constant 8 : index
    %59 = vector.load %arg7[%c6_64, %c8_65] : memref<12x13xf32, #tpu.memory_space<vmem>>, vector<6x4xf32>
    tpu.vector_store %arg7[%c6_64, %c8_65], %58 {strides = array<i32>} : memref<12x13xf32, #tpu.memory_space<vmem>>, vector<6x4xf32>,
    %c0_66 = arith.constant 0 : index
    %c0_67 = arith.constant 0 : index
    %60 = vector.load %arg3[%c0_66, %c0_67] : memref<8x13xf32, #tpu.memory_space<vmem>>, vector<8x13xf32>
    %c0_68 = arith.constant 0 : index
    %c0_69 = arith.constant 0 : index
    %61 = vector.load %arg7[%c0_68, %c0_69] : memref<12x13xf32, #tpu.memory_space<vmem>>, vector<12x13xf32>
    %cst_70 = arith.constant dense<0.000000e+00> : vector<8x12xf32>
    %62 = tpu.matmul %60, %61, %cst_70 {dimension_numbers = #tpu.dot_dimension_numbers<[1], [1], [0], [0], [0, 0, 1, 0], [], []>} : vector<8x13xf32>, vector<12x13xf32>, vector<8x12xf32> -> vector<8x12xf32>
    %cst_71 = arith.constant 0.000000e+00 : f32
    %63 = vector.broadcast %cst_71 : f32 to vector<8x12xf32>
    %64 = arith.cmpf ogt, %62, %63 : vector<8x12xf32>
    %65 = vector.broadcast %1 : f32 to vector<8x12xf32>
    %66 = arith.mulf %65, %62 : vector<8x12xf32>
    %67 = arith.select %64, %62, %66 : vector<8x12xi1>, vector<8x12xf32>
    %68 = vector.extract_strided_slice %67 {offsets = [0, 0], sizes = [8, 6], strides = [1, 1]} : vector<8x12xf32> to vector<8x6xf32>
    %c0_72 = arith.constant 0 : index
    %c0_73 = arith.constant 0 : index
    %c0_74 = arith.constant 0 : index
    %69 = vector.load %arg5[%c0_72, %c0_73, %c0_74] : memref<2x8x6xf32, #tpu.memory_space<vmem>>, vector<1x8x6xf32>
    %70 = vector.shape_cast %69 : vector<1x8x6xf32> to vector<8x6xf32>
    %71 = vector.shape_cast %68 : vector<8x6xf32> to vector<1x8x6xf32>
    tpu.vector_store %arg5[%c0_72, %c0_73, %c0_74], %71 {strides = array<i32>} : memref<2x8x6xf32, #tpu.memory_space<vmem>>, vector<1x8x6xf32>,
    %72 = vector.extract_strided_slice %67 {offsets = [0, 6], sizes = [8, 6], strides = [1, 1]} : vector<8x12xf32> to vector<8x6xf32>
    %c1_75 = arith.constant 1 : index
    %c0_76 = arith.constant 0 : index
    %c0_77 = arith.constant 0 : index
    %73 = vector.load %arg5[%c1_75, %c0_76, %c0_77] : memref<2x8x6xf32, #tpu.memory_space<vmem>>, vector<1x8x6xf32>
    %74 = vector.shape_cast %73 : vector<1x8x6xf32> to vector<8x6xf32>
    %75 = vector.shape_cast %72 : vector<8x6xf32> to vector<1x8x6xf32>
    tpu.vector_store %arg5[%c1_75, %c0_76, %c0_77], %75 {strides = array<i32>} : memref<2x8x6xf32, #tpu.memory_space<vmem>>, vector<1x8x6xf32>,
    return
  }
  func.func @transform_0(%arg0: i32) -> (i32, i32, i32) {
    %c0_i32 = arith.constant 0 : i32
    %c0_i32_0 = arith.constant 0 : i32
    %c0_i32_1 = arith.constant 0 : i32
    return %arg0, %c0_i32, %c0_i32_0 : i32, i32, i32
  }
  func.func @transform_1(%arg0: i32) -> (i32, i32) {
    %c0_i32 = arith.constant 0 : i32
    %c0_i32_0 = arith.constant 0 : i32
    %c0_i32_1 = arith.constant 0 : i32
    return %c0_i32, %c0_i32_0 : i32, i32
  }
  func.func @transform_2(%arg0: i32) -> (i32, i32) {
    %c0_i32 = arith.constant 0 : i32
    %c0_i32_0 = arith.constant 0 : i32
    %c0_i32_1 = arith.constant 0 : i32
    return %c0_i32, %c0_i32_0 : i32, i32
  }
  func.func @transform_3(%arg0: i32) -> i32 {
    %c0_i32 = arith.constant 0 : i32
    %c0_i32_0 = arith.constant 0 : i32
    return %c0_i32 : i32
  }
  func.func @transform_4(%arg0: i32) -> (i32, i32, i32) {
    %c0_i32 = arith.constant 0 : i32
    %c0_i32_0 = arith.constant 0 : i32
    %c0_i32_1 = arith.constant 0 : i32
    return %arg0, %c0_i32, %c0_i32_0 : i32, i32, i32
  }
}

</mosaic_0001>

<llo_original>
// kernel: tpu_custom_call.1
$region0: #{tpu_custom_call.1}
  #allocation0 [shape = 'u32[]', space=smem, size = 0x4, offset = 0x4, fixed_abs, tag = 'smem constant byte address 0x4 - core index']
  #allocation1 [shape = 'u32[144,128]{1,0:T(1,128)}', space=vmem, size = 0x12000, scoped, tag = 'internal scratch']
  #allocation2 [shape = 'f32[13,32]{1,0:T(8,128)}', space=vmem, size = 0x2000, scoped, tag = 'scratch operand']
  #allocation3 [shape = 'f32[12,13]{1,0:T(8,128)}', space=vmem, size = 0x2000, scoped, tag = 'scratch operand']
  #allocation4 [shape = 'f32[16,4]{1,0:T(8,128)}', space=vmem, size = 0x2000, scoped, tag = 'scratch operand']
  %s0 = inlined_call_operand.hbm [shape: f32[2,4,16], index: 0, kind: input, shape index: {}]
  %s1 = inlined_call_operand.hbm [shape: f32[4,13], index: 1, kind: input, shape index: {}]
  %s2 = inlined_call_operand.hbm [shape: f32[8,13], index: 2, kind: input, shape index: {}]
  %s3 = inlined_call_operand.vmem [shape: f32[2], index: 3, kind: input, shape index: {}]
  %s4 = inlined_call_operand.vmem [shape: f32[2,8,6], index: 4, kind: output, shape index: {}]
  %s5 = sld [smem:[#allocation0]]
  $region42: #{tpu_custom_call.1} parent=0
    _
  %s7 = ssub.s32 1, %s5
  %s8 = scalar_select 0, %s7, %s5
  $region1: #{tpu_custom_call.1} parent=0
    #allocation5 [shape = 'u8[4096]{0}', space=vmem, size = 0x1000, scoped, tag = 'input window, operand 0, single buffered']
    #allocation6 [shape = 's32[1]{0}', space=sflag, size = 0x4, scoped, tag = 'scoped memory for tpu_custom_call.1']
    #allocation7 [shape = 's32[1]{0}', space=sflag, size = 0x4, scoped, tag = 'scoped memory for tpu_custom_call.1']
    #allocation8 [shape = 'u8[2048]{0}', space=vmem, size = 0x800, scoped, tag = 'input window, operand 1, single buffered']
    #allocation9 [shape = 's32[1]{0}', space=sflag, size = 0x4, scoped, tag = 'scoped memory for tpu_custom_call.1']
    #allocation10 [shape = 'u8[4096]{0}', space=vmem, size = 0x1000, scoped, tag = 'input window, operand 2, single buffered']
    #allocation11 [shape = 'u8[512]{0}', space=smem, size = 0x200, scoped, tag = 'input window, operand 3, single buffered']
    %9 = vsyncpa [#allocation6], 0
    %10 = vsyncpa [#allocation9], 0
    %11 = vsyncpa [#allocation7], 0
    // Predicated region
    $region2: #{tpu_custom_call.1} parent=1 // pred_check
      _
    $region3: #{tpu_custom_call.1} parent=1 // pred_check_branch
      %13 = sbr.rel (0) target = $region5
    $region4: #{tpu_custom_call.1} parent=1 // pred_region
      %s15 = ssub.s32 128, 128
      %16 = vsyncadd [#allocation6], %s15
      %s17 = sshll.u32 [#allocation5], 4
      %s18 = int_to_ptr.vmem [resolvable:$true] %s17
      %23 = dma.hbm_to_vmem [thread:$0]  %s0, 128, %s18, [#allocation6], 64, 64, 4
    $region5: #{tpu_custom_call.1} parent=1 // pred_fallthru
      _
    // Predicated region
    $region6: #{tpu_custom_call.1} parent=1 // pred_check
      _
    $region7: #{tpu_custom_call.1} parent=1 // pred_check_branch
      %25 = sbr.rel (0) target = $region9
    $region8: #{tpu_custom_call.1} parent=1 // pred_region
      %s27 = ssub.s32 64, 64
      %28 = vsyncadd [#allocation9], %s27
      %s30 = sshll.u32 [#allocation8], 4
      %s31 = int_to_ptr.vmem [resolvable:$true] %s30
      %33 = dma.hbm_to_vmem [thread:$0]  %s1, 64, %s31, [#allocation9]
    $region9: #{tpu_custom_call.1} parent=1 // pred_fallthru
      _
    // Predicated region
    $region10: #{tpu_custom_call.1} parent=1 // pred_check
      _
    $region11: #{tpu_custom_call.1} parent=1 // pred_check_branch
      %35 = sbr.rel (0) target = $region13
    $region12: #{tpu_custom_call.1} parent=1 // pred_region
      %s37 = ssub.s32 128, 128
      %38 = vsyncadd [#allocation9], %s37
      %s40 = sshll.u32 [#allocation10], 4
      %s41 = int_to_ptr.vmem [resolvable:$true] %s40
      %43 = dma.hbm_to_vmem [thread:$0]  %s2, 128, %s41, [#allocation9]
    $region13: #{tpu_custom_call.1} parent=1 // pred_fallthru
      _
    // Predicated region
    $region14: #{tpu_custom_call.1} parent=1 // pred_check
      _
    $region15: #{tpu_custom_call.1} parent=1 // pred_check_branch
      %45 = sbr.rel (0) target = $region17
    $region16: #{tpu_custom_call.1} parent=1 // pred_region
      %s47 = ssub.s32 16, 16
      %48 = vsyncadd [#allocation7], %s47
      %s50 = sshll.u32 %s3, 4
      %s51 = int_to_ptr.vmem [resolvable:$true] %s50
      %53 = dma.vmem_to_smem %s51, 16, [#allocation11], [#allocation7]
    $region17: #{tpu_custom_call.1} parent=1 // pred_fallthru
      _
    // Predicated region
    $region18: #{tpu_custom_call.1} parent=1 // pred_check
      _
    $region19: #{tpu_custom_call.1} parent=1 // pred_check_branch
      %55 = sbr.rel (0) target = $region21
    $region20: #{tpu_custom_call.1} parent=1 // pred_region
      %56 = dma.done [#allocation6], 128
    $region21: #{tpu_custom_call.1} parent=1 // pred_fallthru
      _
    // Predicated region
    $region22: #{tpu_custom_call.1} parent=1 // pred_check
      _
    $region23: #{tpu_custom_call.1} parent=1 // pred_check_branch
      %58 = sbr.rel (0) target = $region25
    $region24: #{tpu_custom_call.1} parent=1 // pred_region
      %59 = dma.done [#allocation9], 64
    $region25: #{tpu_custom_call.1} parent=1 // pred_fallthru
      _
    // Predicated region
    $region26: #{tpu_custom_call.1} parent=1 // pred_check
      _
    $region27: #{tpu_custom_call.1} parent=1 // pred_check_branch
      %61 = sbr.rel (0) target = $region29
    $region28: #{tpu_custom_call.1} parent=1 // pred_region
      %62 = dma.done [#allocation9], 128
    $region29: #{tpu_custom_call.1} parent=1 // pred_fallthru
      _
    // Predicated region
    $region30: #{tpu_custom_call.1} parent=1 // pred_check
      _
    $region31: #{tpu_custom_call.1} parent=1 // pred_check_branch
      %64 = sbr.rel (0) target = $region33
    $region32: #{tpu_custom_call.1} parent=1 // pred_region
      %65 = dma.done [#allocation7], 16
    $region33: #{tpu_custom_call.1} parent=1 // pred_fallthru
      _
    %66 = sfence
    %s67 = sld [smem:[#allocation11]]
    %s68 = sld [smem:[#allocation11 + $0x1]]
    %vm69 = vcmask 253952
    %70 = vst.msk [vmem:[#allocation2 + $0xc] sm:$0x1] %vm69, 1.0
    %v71 = vld [vmem:[#allocation5] sm:$0xf]
    %vm72 = vcmask 11264
    %73 = vst.msk [vmem:[#allocation2] sm:$0xf] %vm72, 0.0
    %75 = vrot.lane.b32.xlu0 %v71, 2
    %v76 = vpop.permute.xlu0 %75
    %vm78 = vcmask 125968
    %79 = vst.msk [vmem:[#allocation2] sm:$0xf] %vm78, %v76
    %vm80 = vcmask 125952
    %81 = vst.msk [vmem:[#allocation2 + $0x4] sm:$0xf] %vm80, %v71
    %82 = vrot.lane.b32.xlu0 %v71, 126
    %v83 = vpop.permute.xlu0 %82
    %vm85 = vcmask 109568
    %86 = vst.msk [vmem:[#allocation2 + $0x8] sm:$0xf] %vm85, %v83
    %vm87 = vcmask 126064
    %88 = vst.msk [vmem:[#allocation2 + $0x8] sm:$0xf] %vm87, 0.0
    %s89 = scalar_lea.vmem [#allocation5], 4
    %v90 = vld [vmem:[%s89] sm:$0xf]
    %vm91 = vcmask 142464
    %92 = vst.msk [vmem:[#allocation2] sm:$0xf] %vm91, 0.0
    %94 = vrot.lane.b32.xlu0 %v90, 18
    %v95 = vpop.permute.xlu0 %94
    %vm97 = vcmask 257168
    %98 = vst.msk [vmem:[#allocation2] sm:$0xf] %vm97, %v95
    %99 = vrot.lane.b32.xlu0 %v90, 16
    %v100 = vpop.permute.xlu0 %99
    %vm102 = vcmask 257152
    %103 = vst.msk [vmem:[#allocation2 + $0x4] sm:$0xf] %vm102, %v100
    %104 = vrot.lane.b32.xlu0 %v90, 14
    %v105 = vpop.permute.xlu0 %104
    %vm107 = vcmask 240768
    %108 = vst.msk [vmem:[#allocation2 + $0x8] sm:$0xf] %vm107, %v105
    %vm109 = vcmask 257264
    %110 = vst.msk [vmem:[#allocation2 + $0x8] sm:$0xf] %vm109, 0.0
    %v111 = vld [vmem:[#allocation8] sm:$0xf]
    %v112 = vld [vmem:[#allocation2] sm:$0xff]
    %v113 = vld [vmem:[#allocation2 + $0x8] sm:$0x1f]
    %vm114 = vcmask 105472
    %v116 = vsel %vm114, %v111, 0
    %vm118 = vcmask 1044480
    %v120 = vsel %vm118, %v113, 0
    %122 = vmatprep.subr.mxu0 0.0
    %123 = vmatpush1.msra.mxu0 %v112
    %124 = vmatprep.subr.mxu0 0.0
    %125 = vmatpush1.msra.mxu0 %v120
    %126 = vmatprep.subr.mxu0 0.0
    %127 = vmatpush1.msra.mxu0 0.0
    %128 = vmatprep.subr.mxu0 0.0
    %129 = vmatpush1.msra.mxu0 0.0
    %130 = vmatprep.subr.mxu0 0.0
    %131 = vmatpush1.msra.mxu0 0.0
    %132 = vmatprep.subr.mxu0 0.0
    %133 = vmatpush1.msra.mxu0 0.0
    %134 = vmatprep.subr.mxu0 0.0
    %135 = vmatpush1.msra.mxu0 0.0
    %136 = vmatprep.subr.mxu0 0.0
    %137 = vmatpush1.msra.mxu0 0.0
    %138 = vmatprep.subr.mxu0 0.0
    %139 = vmatpush1.msra.mxu0 0.0
    %140 = vmatprep.subr.mxu0 0.0
    %141 = vmatpush1.msra.mxu0 0.0
    %142 = vmatprep.subr.mxu0 0.0
    %143 = vmatpush1.msra.mxu0 0.0
    %144 = vmatprep.subr.mxu0 0.0
    %145 = vmatpush1.msra.mxu0 0.0
    %146 = vmatprep.subr.mxu0 0.0
    %147 = vmatpush1.msra.mxu0 0.0
    %148 = vmatprep.subr.mxu0 0.0
    %149 = vmatpush1.msra.mxu0 0.0
    %150 = vmatprep.subr.mxu0 0.0
    %151 = vmatpush1.msra.mxu0 0.0
    %152 = vmatprep.subr.mxu0 0.0
    %153 = vmatpush1.msra.mxu0 0.0
    %154 = vmatprep.subr.mxu0 0.0
    %155 = vmatpush1.msra.mxu0 0.0
    %156 = vmatprep.subr.mxu0 0.0
    %157 = vmatpush1.msra.mxu0 0.0
    %158 = vmatprep.subr.mxu0 0.0
    %159 = vmatpush1.msra.mxu0 0.0
    %160 = vmatprep.subr.mxu0 0.0
    %161 = vmatpush1.msra.mxu0 0.0
    %162 = vmatprep.subr.mxu0 0.0
    %163 = vmatpush1.msra.mxu0 0.0
    %164 = vmatprep.subr.mxu0 0.0
    %165 = vmatpush1.msra.mxu0 0.0
    %166 = vmatprep.subr.mxu0 0.0
    %167 = vmatpush1.msra.mxu0 0.0
    %168 = vmatprep.subr.mxu0 0.0
    %169 = vmatpush1.msra.mxu0 0.0
    %170 = vmatprep.subr.mxu0 0.0
    %171 = vmatpush1.msra.mxu0 0.0
    %172 = vmatprep.subr.mxu0 0.0
    %173 = vmatpush1.msra.mxu0 0.0
    %174 = vmatprep.subr.mxu0 0.0
    %175 = vmatpush1.msra.mxu0 0.0
    %176 = vmatprep.subr.mxu0 0.0
    %177 = vmatpush1.msra.mxu0 0.0
    %178 = vmatprep.subr.mxu0 0.0
    %179 = vmatpush1.msra.mxu0 0.0
    %180 = vmatprep.subr.mxu0 0.0
    %181 = vmatpush1.msra.mxu0 0.0
    %182 = vmatprep.subr.mxu0 0.0
    %183 = vmatpush1.msra.mxu0 0.0
    %184 = vmatprep.subr.mxu0 0.0
    %185 = vmatpush1.msra.mxu0 0.0
    %186 = vmatprep.mubr.f32.mxu0 0.0
    %187 = vmatmul.mubr.f32.gmra.mrb[0].mxu0 %v116
    %v188 = vpop.f32.mrb[0].mxu0
    %v189 = vadd.f32 0.0, %v188
    %v190 = vpop.f32.mrb[0].mxu0
    %191 = vdwg.mxu0
    %vm192 = vcmp.gt.f32.partialorder %v189, 0.0
    %v193 = vstv %s67
    %v194 = vmul.f32 %v193, %v189
    %v195 = vsel %vm192, %v189, %v194
    %vm196 = vcmask 105568
    %197 = vst.msk [vmem:[#allocation3] sm:$0xff] %vm196, 1.0
    %vm198 = vcmask 101472
    %199 = vst.msk [vmem:[#allocation3 + $0x8] sm:$0xf] %vm198, 1.0
    %v200 = vld [vmem:[#allocation5] sm:$0xf]
    %v201 = vadd.f32 %v195, %v200
    %202 = vxpose.xlu0.b32.start [1/16] %v201, 128
    %203 = vxpose.xlu0.b32.cont [2/16] 0.0, 128
    %204 = vxpose.xlu0.b32.cont [3/16] 0.0, 128
    %205 = vxpose.xlu0.b32.cont [4/16] 0.0, 128
    %206 = vxpose.xlu0.b32.cont [5/16] 0.0, 128
    %207 = vxpose.xlu0.b32.cont [6/16] 0.0, 128
    %208 = vxpose.xlu0.b32.cont [7/16] 0.0, 128
    %209 = vxpose.xlu0.b32.cont [8/16] 0.0, 128
    %210 = vxpose.xlu0.b32.cont [9/16] 0.0, 128
    %211 = vxpose.xlu0.b32.cont [10/16] 0.0, 128
    %212 = vxpose.xlu0.b32.cont [11/16] 0.0, 128
    %213 = vxpose.xlu0.b32.cont [12/16] 0.0, 128
    %214 = vxpose.xlu0.b32.cont [13/16] 0.0, 128
    %215 = vxpose.xlu0.b32.cont [14/16] 0.0, 128
    %216 = vxpose.xlu0.b32.cont [15/16] 0.0, 128
    %217 = vxpose.xlu0.b32.end [16/16] 0.0, 128
    %v218 = vpop.trf.xlu0
    %v219 = vpop.trf.xlu0
    %v220 = vpop.trf.xlu0
    %v221 = vpop.trf.xlu0
    %v222 = vpop.trf.xlu0
    %v223 = vpop.trf.xlu0
    %v224 = vpop.trf.xlu0
    %v225 = vpop.trf.xlu0
    %v226 = vpop.trf.xlu0
    %v227 = vpop.trf.xlu0
    %v228 = vpop.trf.xlu0
    %v229 = vpop.trf.xlu0
    %v230 = vpop.trf.xlu0
    %v231 = vpop.trf.xlu0
    %v232 = vpop.trf.xlu0
    %v233 = vpop.trf.xlu0
    %vm234 = vcmask 31744
    %235 = vst.msk [vmem:[#allocation4] sm:$0xff] %vm234, %v218
    %236 = vst.msk [vmem:[#allocation4 + $0x8] sm:$0xff] %vm234, %v219
    %v237 = vld [vmem:[#allocation4] ss:$2 sm:$0x3f]
    %vm238 = vcmask 29696
    %239 = vst.msk [vmem:[#allocation3] sm:$0x3f] %vm238, %v237
    %s240 = scalar_lea.vmem [#allocation4], 2
    %v241 = vld [vmem:[%s240] ss:$2 sm:$0x3f]
    %243 = vrot.lane.b32.xlu0 %v241, 4
    %v244 = vpop.permute.xlu0 %243
    %vm246 = vcmask 62496
    %247 = vst.msk [vmem:[#allocation3] sm:$0x3f] %vm246, %v244
    %s248 = scalar_lea.vmem [#allocation4], 4
    %v249 = vld [vmem:[%s248] ss:$2 sm:$0x3f]
    %251 = vrot.lane.b32.xlu0 %v249, 8
    %v252 = vpop.permute.xlu0 %251
    %vm254 = vcmask 95296
    %255 = vst.msk [vmem:[#allocation3] sm:$0x3f] %vm254, %v252
    %v256 = vld [vmem:[%s89] sm:$0xf]
    %258 = vrot.lane.b32.xlu0 %v256, 16
    %v259 = vpop.permute.xlu0 %258
    %v261 = vadd.f32 %v195, %v259
    %263 = vrot.lane.b32.xlu0 %v261, 112
    %v264 = vpop.permute.xlu0 %263
    %266 = vxpose.xlu0.b32.start [1/16] %v264, 128
    %267 = vxpose.xlu0.b32.cont [2/16] 0.0, 128
    %268 = vxpose.xlu0.b32.cont [3/16] 0.0, 128
    %269 = vxpose.xlu0.b32.cont [4/16] 0.0, 128
    %270 = vxpose.xlu0.b32.cont [5/16] 0.0, 128
    %271 = vxpose.xlu0.b32.cont [6/16] 0.0, 128
    %272 = vxpose.xlu0.b32.cont [7/16] 0.0, 128
    %273 = vxpose.xlu0.b32.cont [8/16] 0.0, 128
    %274 = vxpose.xlu0.b32.cont [9/16] 0.0, 128
    %275 = vxpose.xlu0.b32.cont [10/16] 0.0, 128
    %276 = vxpose.xlu0.b32.cont [11/16] 0.0, 128
    %277 = vxpose.xlu0.b32.cont [12/16] 0.0, 128
    %278 = vxpose.xlu0.b32.cont [13/16] 0.0, 128
    %279 = vxpose.xlu0.b32.cont [14/16] 0.0, 128
    %280 = vxpose.xlu0.b32.cont [15/16] 0.0, 128
    %281 = vxpose.xlu0.b32.end [16/16] 0.0, 128
    %v282 = vpop.trf.xlu0
    %v283 = vpop.trf.xlu0
    %v284 = vpop.trf.xlu0
    %v285 = vpop.trf.xlu0
    %v286 = vpop.trf.xlu0
    %v287 = vpop.trf.xlu0
    %v288 = vpop.trf.xlu0
    %v289 = vpop.trf.xlu0
    %v290 = vpop.trf.xlu0
    %v291 = vpop.trf.xlu0
    %v292 = vpop.trf.xlu0
    %v293 = vpop.trf.xlu0
    %v294 = vpop.trf.xlu0
    %v295 = vpop.trf.xlu0
    %v296 = vpop.trf.xlu0
    %v297 = vpop.trf.xlu0
    %298 = vst.msk [vmem:[#allocation4] sm:$0xff] %vm234, %v282
    %299 = vst.msk [vmem:[#allocation4 + $0x8] sm:$0xff] %vm234, %v283
    %v300 = vld [vmem:[#allocation4] ss:$2 sm:$0x3f]
    %301 = vst.msk [vmem:[#allocation3 + $0x6] sm:$0x3f] %vm238, %v300
    %v302 = vld [vmem:[%s240] ss:$2 sm:$0x3f]
    %304 = vrot.lane.b32.xlu0 %v302, 4
    %v305 = vpop.permute.xlu0 %304
    %307 = vst.msk [vmem:[#allocation3 + $0x6] sm:$0x3f] %vm246, %v305
    %v308 = vld [vmem:[%s248] ss:$2 sm:$0x3f]
    %310 = vrot.lane.b32.xlu0 %v308, 8
    %v311 = vpop.permute.xlu0 %310
    %313 = vst.msk [vmem:[#allocation3 + $0x6] sm:$0x3f] %vm254, %v311
    %v314 = vld [vmem:[#allocation10] sm:$0xff]
    %v315 = vld [vmem:[#allocation3] sm:$0xff]
    %v316 = vld [vmem:[#allocation3 + $0x8] sm:$0xf]
    %v318 = vsel %vm114, %v314, 0
    %v321 = vsel %vm114, %v315, 0
    %v324 = vsel %vm114, %v316, 0
    %326 = vmatprep.subr.mxu0 0.0
    %327 = vmatpush1.xpose.msra.mxu0 %v321
    %328 = vmatprep.subr.mxu0 0.0
    %329 = vmatpush1.xpose.msra.mxu0 %v324
    %330 = vmatprep.subr.mxu0 0.0
    %331 = vmatpush1.xpose.msra.mxu0 0.0
    %332 = vmatprep.subr.mxu0 0.0
    %333 = vmatpush1.xpose.msra.mxu0 0.0
    %334 = vmatprep.subr.mxu0 0.0
    %335 = vmatpush1.xpose.msra.mxu0 0.0
    %336 = vmatprep.subr.mxu0 0.0
    %337 = vmatpush1.xpose.msra.mxu0 0.0
    %338 = vmatprep.subr.mxu0 0.0
    %339 = vmatpush1.xpose.msra.mxu0 0.0
    %340 = vmatprep.subr.mxu0 0.0
    %341 = vmatpush1.xpose.msra.mxu0 0.0
    %342 = vmatprep.subr.mxu0 0.0
    %343 = vmatpush1.xpose.msra.mxu0 0.0
    %344 = vmatprep.subr.mxu0 0.0
    %345 = vmatpush1.xpose.msra.mxu0 0.0
    %346 = vmatprep.subr.mxu0 0.0
    %347 = vmatpush1.xpose.msra.mxu0 0.0
    %348 = vmatprep.subr.mxu0 0.0
    %349 = vmatpush1.xpose.msra.mxu0 0.0
    %350 = vmatprep.subr.mxu0 0.0
    %351 = vmatpush1.xpose.msra.mxu0 0.0
    %352 = vmatprep.subr.mxu0 0.0
    %353 = vmatpush1.xpose.msra.mxu0 0.0
    %354 = vmatprep.subr.mxu0 0.0
    %355 = vmatpush1.xpose.msra.mxu0 0.0
    %356 = vmatprep.subr.mxu0 0.0
    %357 = vmatpush1.xpose.msra.mxu0 0.0
    %358 = vmatprep.subr.mxu0 0.0
    %359 = vmatpush1.xpose.msra.mxu0 0.0
    %360 = vmatprep.subr.mxu0 0.0
    %361 = vmatpush1.xpose.msra.mxu0 0.0
    %362 = vmatprep.subr.mxu0 0.0
    %363 = vmatpush1.xpose.msra.mxu0 0.0
    %364 = vmatprep.subr.mxu0 0.0
    %365 = vmatpush1.xpose.msra.mxu0 0.0
    %366 = vmatprep.subr.mxu0 0.0
    %367 = vmatpush1.xpose.msra.mxu0 0.0
    %368 = vmatprep.subr.mxu0 0.0
    %369 = vmatpush1.xpose.msra.mxu0 0.0
    %370 = vmatprep.subr.mxu0 0.0
    %371 = vmatpush1.xpose.msra.mxu0 0.0
    %372 = vmatprep.subr.mxu0 0.0
    %373 = vmatpush1.xpose.msra.mxu0 0.0
    %374 = vmatprep.subr.mxu0 0.0
    %375 = vmatpush1.xpose.msra.mxu0 0.0
    %376 = vmatprep.subr.mxu0 0.0
    %377 = vmatpush1.xpose.msra.mxu0 0.0
    %378 = vmatprep.subr.mxu0 0.0
    %379 = vmatpush1.xpose.msra.mxu0 0.0
    %380 = vmatprep.subr.mxu0 0.0
    %381 = vmatpush1.xpose.msra.mxu0 0.0
    %382 = vmatprep.subr.mxu0 0.0
    %383 = vmatpush1.xpose.msra.mxu0 0.0
    %384 = vmatprep.subr.mxu0 0.0
    %385 = vmatpush1.xpose.msra.mxu0 0.0
    %386 = vmatprep.subr.mxu0 0.0
    %387 = vmatpush1.xpose.msra.mxu0 0.0
    %388 = vmatprep.subr.mxu0 0.0
    %389 = vmatpush1.xpose.msra.mxu0 0.0
    %390 = vmatprep.mubr.f32.mxu0 0.0
    %391 = vmatmul.mubr.f32.gmra.mrb[0].mxu0 %v318
    %v392 = vpop.f32.mrb[0].mxu0
    %v393 = vadd.f32 0.0, %v392
    %v394 = vpop.f32.mrb[0].mxu0
    %395 = vdwg.mxu0
    %vm396 = vcmp.gt.f32.partialorder %v393, 0.0
    %v397 = vstv %s68
    %v398 = vmul.f32 %v397, %v393
    %v399 = vsel %vm396, %v393, %v398
    %vm400 = vcmask 48128
    %401 = vst.msk [vmem:[%s4] sm:$0xff] %vm400, %v399
    %403 = vrot.lane.b32.xlu0 %v399, 122
    %v404 = vpop.permute.xlu0 %403
    %s406 = scalar_lea.vmem %s4, 8
    %407 = vst.msk [vmem:[%s406] sm:$0xff] %vm400, %v404
    // Predicated region
    $region34: #{tpu_custom_call.1} parent=1 // pred_check
      _
    $region35: #{tpu_custom_call.1} parent=1 // pred_check_branch
      %409 = sbr.rel (0) target = $region37
    $region36: #{tpu_custom_call.1} parent=1 // pred_region
      _
    $region37: #{tpu_custom_call.1} parent=1 // pred_fallthru
      _
    // Predicated region
    $region38: #{tpu_custom_call.1} parent=1 // pred_check
      _
    $region39: #{tpu_custom_call.1} parent=1 // pred_check_branch
      %411 = sbr.rel (0) target = $region41
    $region40: #{tpu_custom_call.1} parent=1 // pred_region
      _
    $region41: #{tpu_custom_call.1} parent=1 // pred_fallthru
      _
    %412 = vsyncpa [#allocation6], 1
    %413 = vsyncpa [#allocation9], 1
    %414 = vsyncpa [#allocation7], 1

</llo_original>
